<compile_context>
chip_gen: v7x
topology: tpu7x:2x2x1
jax: 0.10.0
libtpu: 0.0.40
codegen_flags: <defaults>
</compile_context>

<pallas_src>
import functools
from typing import NamedTuple

import jax
import jax.numpy as jnp
from jax.experimental import pallas as pl
from jax.experimental.pallas import tpu as pltpu


def _round_up(x, m):
    return ((x + m - 1) // m) * m


def _pick_tile(padded_dim, desired):
    """Largest multiple of 128 that divides `padded_dim` and is <= `desired`.

    `padded_dim` is itself a multiple of 128.  Choosing a divisor avoids
    over-padding the K/N axes to a multiple of the default tile.
    """
    if padded_dim <= desired:
        return padded_dim
    m = padded_dim // 128
    d = max(desired // 128, 1)
    while m % d:
        d -= 1
    return d * 128


def _linear_kernel(x_ref, wt_ref, b_ref, o_ref):
    # x_ref : (tm, tk) bf16    wt_ref: (tk, tn) bf16 (pre-transposed W)
    # b_ref : (1,  tn) f32     o_ref : (tm, tn) f32, resident across k
    k = pl.program_id(2)

    @pl.when(k == 0)
    def _():
        # Initialize the resident output block with the bias: no separate
        # accumulator scratch and no epilogue add/copy.
        o_ref[...] = jnp.broadcast_to(b_ref[...], o_ref.shape)

    # MXU matmul in its natural (M,K)x(K,N) shape, f32 accumulation.
    o_ref[...] += jnp.dot(x_ref[...], wt_ref[...],
                          preferred_element_type=jnp.float32)


class LRParams(NamedTuple):
    wt: jax.Array        # (Fp, Cp) transposed, zero-padded, bf16
    bias: jax.Array      # (1, Cp)  zero-padded, f32
    num_classes: int
    feature_dims: int


def prepare_lr_params(weight, bias, *, operand_dtype=jnp.bfloat16):
    """One-time preparation of nn.Linear params (hoisted out of per-call path):
    transpose W to (F, C), zero-pad F/C to multiples of 128, cast to bf16."""
    C, F = weight.shape
    Fp, Cp = _round_up(F, 128), _round_up(C, 128)
    wt = jnp.zeros((Fp, Cp), operand_dtype)
    wt = wt.at[:F, :C].set(weight.T.astype(operand_dtype))
    bp = jnp.zeros((1, Cp), jnp.float32).at[0, :C].set(bias.astype(jnp.float32))
    return LRParams(wt, bp, C, F)


@functools.partial(
    jax.jit,
    static_argnames=("num_classes", "tm", "tn", "tk", "vmem_limit_bytes"))
def _lr_forward_impl(x, wt, bias, *, num_classes, tm, tn, tk, vmem_limit_bytes):
    B, F = x.shape
    Fp, Cp = wt.shape

    # Clamp tiles to the (128-aligned) problem size; tn/tk must divide Cp/Fp.
    tm = min(tm, _round_up(B, 8))
    tn = _pick_tile(Cp, tn)
    tk = _pick_tile(Fp, tk)

    # Only the contraction axis must be zero-padded for correctness (garbage
    # in ragged B/C tail blocks never reaches a kept output element).  Under
    # jit this pad fuses with the single unavoidable bf16 cast of x.
    xp = x.astype(wt.dtype)
    if Fp != F:
        xp = jnp.pad(xp, ((0, 0), (0, Fp - F)))

    grid = (pl.cdiv(B, tm), Cp // tn, Fp // tk)

    out = pl.pallas_call(
        _linear_kernel,
        out_shape=jax.ShapeDtypeStruct((B, Cp), jnp.float32),
        grid=grid,
        in_specs=[
            pl.BlockSpec((tm, tk), lambda i, j, k: (i, k)),   # x tile
            pl.BlockSpec((tk, tn), lambda i, j, k: (k, j)),   # W^T tile
            pl.BlockSpec((1, tn), lambda i, j, k: (0, j)),    # bias (k-resident)
        ],
        out_specs=pl.BlockSpec((tm, tn), lambda i, j, k: (i, j)),
        compiler_params=pltpu.CompilerParams(
            dimension_semantics=("parallel", "parallel", "arbitrary"),
            vmem_limit_bytes=vmem_limit_bytes,
        ),
    )(xp, wt, bias)

    return out[:, :num_classes] if Cp != num_classes else out


def lr_forward(x, params: LRParams, *, tm=1024, tn=1024, tk=1024,
               vmem_limit_bytes=48 * 1024 * 1024):
    """Pallas equivalent of nn.Linear(feature_dims, num_classes)(x)."""
    return _lr_forward_impl(
        x, params.wt, params.bias, num_classes=params.num_classes,
        tm=tm, tn=tn, tk=tk, vmem_limit_bytes=vmem_limit_bytes)


if __name__ == "__main__":
    key = jax.random.PRNGKey(0)

    def ref_f32(x, w, b):
        return x @ w.T + b

    def ref_bf16(x, w, b):   # matches kernel numerics: bf16 operands, f32 acc
        return jnp.dot(x.astype(jnp.bfloat16), w.T.astype(jnp.bfloat16),
                       preferred_element_type=jnp.float32) + b

    # --- Small shapes consistent with the module: batch=8, F=32, C=16 ---
    B, F, C = 8, 32, 16
    kx, kw, kb, key = jax.random.split(key, 4)
    bound = 1.0 / jnp.sqrt(jnp.float32(F))
    w = jax.random.uniform(kw, (C, F), jnp.float32, -bound, bound)
    b = jax.random.uniform(kb, (C,), jnp.float32, -bound, bound)
    x = jax.random.normal(kx, (B, F), jnp.float32)

    params = prepare_lr_params(w, b)
    out = jax.block_until_ready(lr_forward(x, params))
    assert out.shape == (B, C) and out.dtype == jnp.float32
    assert jnp.allclose(out, ref_bf16(x, w, b), atol=1e-3, rtol=1e-3)
    assert jnp.allclose(out, ref_f32(x, w, b), atol=3e-2, rtol=3e-2)

    # --- Larger, unaligned shapes: multi-tile M/N, K reduction, ragged tails ---
    B2, F2, C2 = 300, 700, 260
    kx2, kw2, kb2, key = jax.random.split(key, 4)
    bound2 = 1.0 / jnp.sqrt(jnp.float32(F2))
    w2 = jax.random.uniform(kw2, (C2, F2), jnp.float32, -bound2, bound2)
    b2 = jax.random.uniform(kb2, (C2,), jnp.float32, -bound2, bound2)
    x2 = jax.random.normal(kx2, (B2, F2), jnp.float32)

    params2 = prepare_lr_params(w2, b2)
    out2 = jax.block_until_ready(lr_forward(x2, params2, tm=128, tn=128, tk=256))
    assert out2.shape == (B2, C2)
    assert jnp.allclose(out2, ref_bf16(x2, w2, b2), atol=1e-3, rtol=1e-3)
    assert jnp.allclose(out2, ref_f32(x2, w2, b2), atol=3e-2, rtol=3e-2)

    print("KERNEL_OK")
</pallas_src>

<mosaic_0001>
module attributes {stable_mosaic.version = 11 : i64} {
  func.func @_linear_kernel(%arg0: i32, %arg1: i32, %arg2: i32, %arg3: memref<8x128xbf16, #tpu.memory_space<vmem>>, %arg4: memref<128x128xbf16, #tpu.memory_space<vmem>>, %arg5: memref<1x128xf32, #tpu.memory_space<vmem>>, %arg6: memref<8x128xf32, #tpu.memory_space<vmem>>) attributes {dimension_semantics = [#tpu.dimension_semantics<parallel>, #tpu.dimension_semantics<parallel>, #tpu.dimension_semantics<arbitrary>], iteration_bounds = array<i64: 1, 1, 1>, scalar_prefetch = 0 : i64, scratch_operands = 0 : i64, tpu.core_type = #tpu.core_type<tc>, window_params = [{transform_indices = @transform_0, window_bounds = array<i64: 8, 128>}, {transform_indices = @transform_1, window_bounds = array<i64: 128, 128>}, {transform_indices = @transform_2, window_bounds = array<i64: 1, 128>}, {transform_indices = @transform_3, window_bounds = array<i64: 8, 128>}]} {
    %c0_i32 = arith.constant 0 : i32
    %0 = arith.cmpi eq, %arg2, %c0_i32 : i32
    %1 = arith.extui %0 : i1 to i32
    %c0_i32_0 = arith.constant 0 : i32
    %2 = arith.cmpi ne, %1, %c0_i32_0 : i32
    scf.if %2 {
      %c0_8 = arith.constant 0 : index
      %c0_9 = arith.constant 0 : index
      %9 = vector.load %arg5[%c0_8, %c0_9] : memref<1x128xf32, #tpu.memory_space<vmem>>, vector<1x128xf32>
      %10 = vector.shape_cast %9 : vector<1x128xf32> to vector<1x128xf32>
      %11 = vector.broadcast %10 : vector<1x128xf32> to vector<8x128xf32>
      %c0_10 = arith.constant 0 : index
      %c0_11 = arith.constant 0 : index
      %12 = vector.load %arg6[%c0_10, %c0_11] : memref<8x128xf32, #tpu.memory_space<vmem>>, vector<8x128xf32>
      tpu.vector_store %arg6[%c0_10, %c0_11], %11 {strides = array<i32>} : memref<8x128xf32, #tpu.memory_space<vmem>>, vector<8x128xf32>,
    } else {
    }
    %c0 = arith.constant 0 : index
    %c0_1 = arith.constant 0 : index
    %3 = vector.load %arg6[%c0, %c0_1] : memref<8x128xf32, #tpu.memory_space<vmem>>, vector<8x128xf32>
    %c0_2 = arith.constant 0 : index
    %c0_3 = arith.constant 0 : index
    %4 = vector.load %arg3[%c0_2, %c0_3] : memref<8x128xbf16, #tpu.memory_space<vmem>>, vector<8x128xbf16>
    %c0_4 = arith.constant 0 : index
    %c0_5 = arith.constant 0 : index
    %5 = vector.load %arg4[%c0_4, %c0_5] : memref<128x128xbf16, #tpu.memory_space<vmem>>, vector<128x128xbf16>
    %cst = arith.constant dense<0.000000e+00> : vector<8x128xf32>
    %6 = tpu.matmul %4, %5, %cst {dimension_numbers = #tpu.dot_dimension_numbers<[1], [0], [0], [1], [0, 0, 1, 1], [], []>} : vector<8x128xbf16>, vector<128x128xbf16>, vector<8x128xf32> -> vector<8x128xf32>
    %7 = arith.addf %3, %6 : vector<8x128xf32>
    %c0_6 = arith.constant 0 : index
    %c0_7 = arith.constant 0 : index
    %8 = vector.load %arg6[%c0_6, %c0_7] : memref<8x128xf32, #tpu.memory_space<vmem>>, vector<8x128xf32>
    tpu.vector_store %arg6[%c0_6, %c0_7], %7 {strides = array<i32>} : memref<8x128xf32, #tpu.memory_space<vmem>>, vector<8x128xf32>,
    return
  }
  func.func @transform_0(%arg0: i32, %arg1: i32, %arg2: i32) -> (i32, i32) {
    %c0_i32 = arith.constant 0 : i32
    return %arg0, %arg2 : i32, i32
  }
  func.func @transform_1(%arg0: i32, %arg1: i32, %arg2: i32) -> (i32, i32) {
    %c0_i32 = arith.constant 0 : i32
    return %arg2, %arg1 : i32, i32
  }
  func.func @transform_2(%arg0: i32, %arg1: i32, %arg2: i32) -> (i32, i32) {
    %c0_i32 = arith.constant 0 : i32
    %c0_i32_0 = arith.constant 0 : i32
    return %c0_i32, %arg1 : i32, i32
  }
  func.func @transform_3(%arg0: i32, %arg1: i32, %arg2: i32) -> (i32, i32) {
    %c0_i32 = arith.constant 0 : i32
    return %arg0, %arg1 : i32, i32
  }
}

</mosaic_0001>

<llo_original>
// kernel: _lr_forward_impl.1
$region0: #{_lr_forward_impl.1}
  #allocation0 [shape = 'u32[]', space=smem, size = 0x4, offset = 0x4, fixed_abs, tag = 'smem constant byte address 0x4 - core index']
  #allocation1 [shape = 'u32[144,128]{1,0:T(1,128)}', space=vmem, size = 0x12000, scoped, tag = 'internal scratch']
  %s0 = inlined_call_operand.vmem [shape: bf16[8,128], index: 0, kind: input, shape index: {}]
  %s1 = inlined_call_operand.hbm [shape: bf16[128,128], index: 1, kind: input, shape index: {}]
  %s2 = inlined_call_operand.vmem [shape: f32[1,128], index: 2, kind: input, shape index: {}]
  %s3 = inlined_call_operand.hbm [shape: f32[8,128], index: 3, kind: output, shape index: {}]
  %s4 = sld [smem:[#allocation0]]
  $region30: #{_lr_forward_impl.1} parent=0
    _
  %s6 = ssub.s32 1, %s4
  %s7 = scalar_select 0, %s6, %s4
  $region1: #{_lr_forward_impl.1} parent=0
    #allocation2 [shape = 'u8[32768]{0}', space=vmem, size = 0x8000, scoped, tag = 'input window, operand 1, single buffered']
    #allocation3 [shape = 's32[1]{0}', space=sflag, size = 0x4, scoped, tag = 'scoped memory for _lr_forward_impl.1']
    #allocation4 [shape = 's32[1]{0}', space=sflag, size = 0x4, scoped, tag = 'scoped memory for _lr_forward_impl.1']
    #allocation5 [shape = 'u8[4096]{0}', space=vmem, size = 0x1000, scoped, tag = 'output window, operand 0, single buffered']
    %8 = vsyncpa [#allocation3], 0
    %9 = vsyncpa [#allocation4], 0
    // Predicated region
    $region2: #{_lr_forward_impl.1} parent=1 // pred_check
      _
    $region3: #{_lr_forward_impl.1} parent=1 // pred_check_branch
      %11 = sbr.rel (0) target = $region5
    $region4: #{_lr_forward_impl.1} parent=1 // pred_region
      _
    $region5: #{_lr_forward_impl.1} parent=1 // pred_fallthru
      _
    // Predicated region
    $region6: #{_lr_forward_impl.1} parent=1 // pred_check
      _
    $region7: #{_lr_forward_impl.1} parent=1 // pred_check_branch
      %13 = sbr.rel (0) target = $region9
    $region8: #{_lr_forward_impl.1} parent=1 // pred_region
      %s15 = ssub.s32 1024, 1024
      %16 = vsyncadd [#allocation3], %s15
      %s17 = sshll.u32 [#allocation2], 4
      %s18 = int_to_ptr.vmem [resolvable:$true] %s17
      %23 = dma.hbm_to_vmem [thread:$0]  %s1, 1024, %s18, [#allocation3], 64, 64, 4
    $region9: #{_lr_forward_impl.1} parent=1 // pred_fallthru
      _
    // Predicated region
    $region10: #{_lr_forward_impl.1} parent=1 // pred_check
      _
    $region11: #{_lr_forward_impl.1} parent=1 // pred_check_branch
      %25 = sbr.rel (0) target = $region13
    $region12: #{_lr_forward_impl.1} parent=1 // pred_region
      _
    $region13: #{_lr_forward_impl.1} parent=1 // pred_fallthru
      _
    // Predicated region
    $region14: #{_lr_forward_impl.1} parent=1 // pred_check
      _
    $region15: #{_lr_forward_impl.1} parent=1 // pred_check_branch
      %27 = sbr.rel (0) target = $region17
    $region16: #{_lr_forward_impl.1} parent=1 // pred_region
      %28 = dma.done [#allocation3], 1024
    $region17: #{_lr_forward_impl.1} parent=1 // pred_fallthru
      _
    %p30 = scmp.eq.s32.totalorder 0, 0
    // Predicated region
    $region18: #{_lr_forward_impl.1} parent=1 // pred_check
      %p31 = pneg %p30
    $region19: #{_lr_forward_impl.1} parent=1 // pred_check_branch
      %33 = sbr.rel (%p31) target = $region21
    $region20: #{_lr_forward_impl.1} parent=1 // pred_region
      %v34 = vld [vmem:[%s2] sm:$0x1]
      %v36 = vlaneseq
      %v37 = vshrl.u32 %v36, 7
      %v38 = vsub.s32 0, %v37
      %v39 = vrot.slane %v34, %v38
      %41 = vst [vmem:[#allocation5] sm:$0xff] %v39
    $region21: #{_lr_forward_impl.1} parent=1 // pred_fallthru
      _
    %v42 = vld [vmem:[#allocation5] sm:$0xff]
    %v43 = vld [vmem:[%s0] sm:$0xf]
    %v44 = vld [vmem:[#allocation2] sm:$0xf]
    %v45 = vld [vmem:[#allocation2 + $0x4] sm:$0xf]
    %v46 = vld [vmem:[#allocation2 + $0x8] sm:$0xf]
    %v47 = vld [vmem:[#allocation2 + $0xc] sm:$0xf]
    %v48 = vld [vmem:[#allocation2 + $0x10] sm:$0xf]
    %v49 = vld [vmem:[#allocation2 + $0x14] sm:$0xf]
    %v50 = vld [vmem:[#allocation2 + $0x18] sm:$0xf]
    %v51 = vld [vmem:[#allocation2 + $0x1c] sm:$0xf]
    %v52 = vld [vmem:[#allocation2 + $0x20] sm:$0xf]
    %v53 = vld [vmem:[#allocation2 + $0x24] sm:$0xf]
    %v54 = vld [vmem:[#allocation2 + $0x28] sm:$0xf]
    %v55 = vld [vmem:[#allocation2 + $0x2c] sm:$0xf]
    %v56 = vld [vmem:[#allocation2 + $0x30] sm:$0xf]
    %v57 = vld [vmem:[#allocation2 + $0x34] sm:$0xf]
    %v58 = vld [vmem:[#allocation2 + $0x38] sm:$0xf]
    %v59 = vld [vmem:[#allocation2 + $0x3c] sm:$0xf]
    %v76 = vunpack.c.l.b16 %v44
    %v77 = vunpack.c.l.b16 %v45
    %v78 = vunpack.c.l.b16 %v46
    %v79 = vunpack.c.l.b16 %v47
    %v80 = vunpack.c.l.b16 %v48
    %v81 = vunpack.c.l.b16 %v49
    %v82 = vunpack.c.l.b16 %v50
    %v83 = vunpack.c.l.b16 %v51
    %v84 = vunpack.c.l.b16 %v52
    %v85 = vunpack.c.l.b16 %v53
    %v86 = vunpack.c.l.b16 %v54
    %v87 = vunpack.c.l.b16 %v55
    %v88 = vunpack.c.l.b16 %v56
    %v89 = vunpack.c.l.b16 %v57
    %v90 = vunpack.c.l.b16 %v58
    %v91 = vunpack.c.l.b16 %v59
    %v92 = vpack.c.b16 %v77, %v76
    %v93 = vpack.c.b16 %v79, %v78
    %v94 = vpack.c.b16 %v81, %v80
    %v95 = vpack.c.b16 %v83, %v82
    %v96 = vpack.c.b16 %v85, %v84
    %v97 = vpack.c.b16 %v87, %v86
    %v98 = vpack.c.b16 %v89, %v88
    %v99 = vpack.c.b16 %v91, %v90
    %108 = vmatprep.subr.bf16.mxu0 0
    %109 = vmatpush1.bf16.msra.mxu0 %v92
    %110 = vmatprep.subr.bf16.mxu0 0
    %111 = vmatpush1.bf16.msra.mxu0 %v93
    %112 = vmatprep.subr.bf16.mxu0 0
    %113 = vmatpush1.bf16.msra.mxu0 %v94
    %114 = vmatprep.subr.bf16.mxu0 0
    %115 = vmatpush1.bf16.msra.mxu0 %v95
    %116 = vmatprep.subr.bf16.mxu0 0
    %117 = vmatpush1.bf16.msra.mxu0 %v96
    %118 = vmatprep.subr.bf16.mxu0 0
    %119 = vmatpush1.bf16.msra.mxu0 %v97
    %120 = vmatprep.subr.bf16.mxu0 0
    %121 = vmatpush1.bf16.msra.mxu0 %v98
    %122 = vmatprep.subr.bf16.mxu0 0
    %123 = vmatpush1.bf16.msra.mxu0 %v99
    %124 = vmatprep.subr.bf16.mxu0 0
    %125 = vmatpush1.bf16.msra.mxu0 0
    %126 = vmatprep.subr.bf16.mxu0 0
    %127 = vmatpush1.bf16.msra.mxu0 0
    %128 = vmatprep.subr.bf16.mxu0 0
    %129 = vmatpush1.bf16.msra.mxu0 0
    %130 = vmatprep.subr.bf16.mxu0 0
    %131 = vmatpush1.bf16.msra.mxu0 0
    %132 = vmatprep.subr.bf16.mxu0 0
    %133 = vmatpush1.bf16.msra.mxu0 0
    %134 = vmatprep.subr.bf16.mxu0 0
    %135 = vmatpush1.bf16.msra.mxu0 0
    %136 = vmatprep.subr.bf16.mxu0 0
    %137 = vmatpush1.bf16.msra.mxu0 0
    %138 = vmatprep.subr.bf16.mxu0 0
    %139 = vmatpush1.bf16.msra.mxu0 0
    %140 = vmatprep.mubr.bf16.mxu0 0
    %141 = vmatmul.mubr.bf16.gmra.mrb[0].mxu0 %v43
    %v142 = vpop.f32.mrb[0].mxu0
    %v143 = vadd.f32 0.0, %v142
    %v144 = vpop.f32.mrb[0].mxu0
    %v145 = vpop.f32.mrb[0].mxu0
    %v146 = vpop.f32.mrb[0].mxu0
    %147 = vdwg.mxu0
    %v148 = vadd.f32 %v42, %v143
    %149 = vst [vmem:[#allocation5] sm:$0xff] %v148
    // Predicated region
    $region22: #{_lr_forward_impl.1} parent=1 // pred_check
      _
    $region23: #{_lr_forward_impl.1} parent=1 // pred_check_branch
      %151 = sbr.rel (0) target = $region25
    $region24: #{_lr_forward_impl.1} parent=1 // pred_region
      %s153 = ssub.s32 128, 128
      %154 = vsyncadd [#allocation4], %s153
      %s156 = sshll.u32 [#allocation5], 4
      %s157 = int_to_ptr.vmem [resolvable:$true] %s156
      %159 = dma.vmem_to_hbm [thread:$0]  %s157, 128, %s3, [#allocation4]
    $region25: #{_lr_forward_impl.1} parent=1 // pred_fallthru
      _
    // Predicated region
    $region26: #{_lr_forward_impl.1} parent=1 // pred_check
      _
    $region27: #{_lr_forward_impl.1} parent=1 // pred_check_branch
      %161 = sbr.rel (0) target = $region29
    $region28: #{_lr_forward_impl.1} parent=1 // pred_region
      %162 = dma.done [#allocation4], 128
    $region29: #{_lr_forward_impl.1} parent=1 // pred_fallthru
      _
    %163 = vsyncpa [#allocation3], 1
    %164 = vsyncpa [#allocation4], 1

</llo_original>
